<compile_context>
chip_gen: v5e
topology: v5e:2x2
jax: 0.10.0
libtpu: 0.0.40
codegen_flags: <defaults>
</compile_context>

<pallas_src>
from functools import partial

import jax
import jax.numpy as jnp
from jax.experimental import pallas as pl
from jax.experimental.pallas import tpu as pltpu


def attention_model_kernel(xh_ref, wc_ref, bc_ref, o_ref,
                           *, N, L, H, Dh, Dout, fast_math):
    """Single invocation: full multi-head self-attention + fused (fc_out o fc) for the batch.

    xh_ref : (H*N, L, Dh)   head-split input, head-major batch (used as q, k and v)
    wc_ref : (H, Dh, Dout)  folded per-head weight  Wo.T[h-block] @ Wf.T
    bc_ref : (1, Dout)      folded bias  bo @ Wf.T + bf            (f32)
    o_ref  : (N*L, Dout)
    """
    xh = xh_ref[...]                                     # bf16 on fast path (cast in wrapper)

    # --- scores: one batched contraction over all H*N heads (no 1/sqrt(Dh), matching module) ---
    s = jnp.einsum('bqd,bkd->bqk', xh, xh,
                   preferred_element_type=jnp.float32)   # (H*N, L, L) f32

    # --- softmax over keys, vectorized across all heads; elementwise math kept in f32 ---
    s = s - jnp.max(s, axis=-1, keepdims=True)
    p = jnp.exp(s)
    denom = jnp.sum(p, axis=-1, keepdims=True)
    if fast_math:
        p = p * pl.reciprocal(denom, approx=True)        # divide moved to the (idle) EUP slot
    else:
        p = p / denom

    # --- attention output per (head, batch): batched p @ v ---
    p = p.astype(xh.dtype)
    o = jnp.einsum('bqk,bkd->bqd', p, xh,
                   preferred_element_type=jnp.float32)   # (H*N, L, Dh) f32

    # --- fused (fc_out o fc): per-head matmul against the folded weight, then sum over heads ---
    #   concat_h(o_h) @ Wo.T @ Wf.T + bcomb  ==  sum_h o_h @ Wcomb[h] + bcomb
    oh = o.reshape(H, N * L, Dh).astype(wc_ref.dtype)    # leading-dim split + N,L merge (tiny)
    yh = jnp.einsum('hbd,hdo->hbo', oh, wc_ref[...],
                    preferred_element_type=jnp.float32)  # (H, N*L, Dout) f32
    y = jnp.sum(yh, axis=0) + bc_ref[...]                # (N*L, Dout)

    o_ref[...] = y.astype(o_ref.dtype)


def attention_model_forward(x, w_attn_out, b_attn_out, w_fc, b_fc, num_heads,
                            fast_math=False):
    """x: (N, L, d_model). Returns (N, L, output_dim)."""
    N, L, D = x.shape
    H = num_heads
    Dh = D // H
    Dout = w_fc.shape[0]

    # Wrapper-side layout plumbing + weight folding (plain XLA ops, done once):
    #   head split (head-major batch) and Wcomb[h] = Wo.T[h*Dh:(h+1)*Dh, :] @ Wf.T.
    xh = x.reshape(N, L, H, Dh).transpose(2, 0, 1, 3).reshape(H * N, L, Dh)
    wfT = w_fc.T                                          # (D, Dout)
    woT_blocks = w_attn_out.T.reshape(H, Dh, D)           # block h = rows [h*Dh,(h+1)*Dh) of Wo.T
    wcomb = jnp.einsum('hdk,ko->hdo', woT_blocks, wfT)    # (H, Dh, Dout)
    bcomb = (b_attn_out @ wfT + b_fc).reshape(1, Dout)    # (1, Dout), stays f32

    if fast_math:
        # bf16 MXU operands fed straight from HBM (halves DMA bytes); f32 accumulation in-kernel.
        xh = xh.astype(jnp.bfloat16)
        wcomb = wcomb.astype(jnp.bfloat16)

    kernel = partial(attention_model_kernel,
                     N=N, L=L, H=H, Dh=Dh, Dout=Dout, fast_math=fast_math)

    # Whole problem in one invocation (no grid): everything lives in VMEM for the single step.
    vmem = pltpu.MemorySpace.VMEM
    y = pl.pallas_call(
        kernel,
        out_shape=jax.ShapeDtypeStruct((N * L, Dout), x.dtype),
        in_specs=[pl.BlockSpec(memory_space=vmem)] * 3,
        out_specs=pl.BlockSpec(memory_space=vmem),
    )(xh, wcomb, bcomb)
    return y.reshape(N, L, Dout)


def reference_attention_model(x, w_attn_out, b_attn_out, w_fc, b_fc, num_heads):
    """Pure-JAX reference mirroring the PyTorch AttentionModel.forward."""
    N, L, D = x.shape
    Dh = D // num_heads
    q = x.reshape(N, L, num_heads, Dh)
    scores = jnp.einsum('nqhd,nkhd->nhqk', q, q)          # no scaling, as in the module
    attn = jax.nn.softmax(scores, axis=3)
    out = jnp.einsum('nhql,nlhd->nqhd', attn, q).reshape(N, L, D)
    out = out @ w_attn_out.T + b_attn_out                  # fc_out
    return out @ w_fc.T + b_fc                             # fc


if __name__ == "__main__":
    # Shapes implied by the module: batch=2, seq=8, d_model=32, heads=4, output_dim=16.
    N, L, d_model, num_heads, output_dim = 2, 8, 32, 4, 16

    key0 = jax.random.PRNGKey(0)
    kx, kwo, kbo, kwf, kbf = jax.random.split(key0, 5)

    x = jax.random.normal(kx, (N, L, d_model), dtype=jnp.float32)

    # fc_out: Linear(d_model, d_model) -> W (out, in), b (out,)
    w_attn_out = jax.random.normal(kwo, (d_model, d_model), dtype=jnp.float32) * 0.1
    b_attn_out = jax.random.normal(kbo, (d_model,), dtype=jnp.float32) * 0.1
    # fc: Linear(d_model, output_dim)
    w_fc = jax.random.normal(kwf, (output_dim, d_model), dtype=jnp.float32) * 0.1
    b_fc = jax.random.normal(kbf, (output_dim,), dtype=jnp.float32) * 0.1

    ref = reference_attention_model(x, w_attn_out, b_attn_out, w_fc, b_fc, num_heads)

    # Accurate path (f32 MXU operands).
    out = attention_model_forward(x, w_attn_out, b_attn_out, w_fc, b_fc, num_heads,
                                  fast_math=False)
    out = jax.block_until_ready(out)
    assert out.shape == (N, L, output_dim)
    assert jnp.allclose(out, ref, atol=2e-4, rtol=2e-4), "f32 path mismatch vs reference"

    # Fast-math path (bf16 MXU operands + approx EUP reciprocal; valid on v5e/v6e/v7x).
    out_fast = attention_model_forward(x, w_attn_out, b_attn_out, w_fc, b_fc, num_heads,
                                       fast_math=True)
    out_fast = jax.block_until_ready(out_fast)
    assert out_fast.shape == (N, L, output_dim)
    assert jnp.allclose(out_fast, ref, atol=5e-2, rtol=5e-2), "bf16 path mismatch vs reference"

    print("KERNEL_OK")
</pallas_src>

<mosaic_0001>
module attributes {stable_mosaic.version = 11 : i64} {
  func.func @attention_model_kernel(%arg0: memref<8x8x8xf32, #tpu.memory_space<vmem>>, %arg1: memref<4x8x16xf32, #tpu.memory_space<vmem>>, %arg2: memref<1x16xf32, #tpu.memory_space<vmem>>, %arg3: memref<16x16xf32, #tpu.memory_space<vmem>>) attributes {dimension_semantics = [], scalar_prefetch = 0 : i64, scratch_operands = 0 : i64, tpu.core_type = #tpu.core_type<tc>} {
    %c0 = arith.constant 0 : index
    %c0_0 = arith.constant 0 : index
    %c0_1 = arith.constant 0 : index
    %0 = vector.load %arg0[%c0, %c0_0, %c0_1] : memref<8x8x8xf32, #tpu.memory_space<vmem>>, vector<8x8x8xf32>
    "tpu.trace_start"() <{level = 10 : i32, message = "bqd,bkd->bqk"}> : () -> ()
    %cst = arith.constant dense<0.000000e+00> : vector<8x8x8xf32>
    %1 = tpu.matmul %0, %0, %cst {dimension_numbers = #tpu.dot_dimension_numbers<[2], [2], [1], [1], [0, 0, 0, 1, 1, 1], [0], [0]>} : vector<8x8x8xf32>, vector<8x8x8xf32>, vector<8x8x8xf32> -> vector<8x8x8xf32>
    "tpu.trace_stop"() : () -> ()
    %cst_2 = arith.constant dense<0xFF800000> : vector<8x8xf32>
    %2 = vector.multi_reduction <maximumf>, %1, %cst_2 [2] : vector<8x8x8xf32> to vector<8x8xf32>
    %3 = vector.shape_cast %2 : vector<8x8xf32> to vector<8x8x1xf32>
    %4 = vector.broadcast %3 : vector<8x8x1xf32> to vector<8x8x8xf32>
    %5 = arith.subf %1, %4 : vector<8x8x8xf32>
    %6 = math.exp %5 : vector<8x8x8xf32>
    %cst_3 = arith.constant dense<0.000000e+00> : vector<8x8xf32>
    %7 = vector.multi_reduction <add>, %6, %cst_3 [2] : vector<8x8x8xf32> to vector<8x8xf32>
    %8 = vector.shape_cast %7 : vector<8x8xf32> to vector<8x8x1xf32>
    %9 = vector.broadcast %8 : vector<8x8x1xf32> to vector<8x8x8xf32>
    %10 = arith.divf %6, %9 : vector<8x8x8xf32>
    "tpu.trace_start"() <{level = 10 : i32, message = "bqk,bkd->bqd"}> : () -> ()
    %cst_4 = arith.constant dense<0.000000e+00> : vector<8x8x8xf32>
    %11 = tpu.matmul %10, %0, %cst_4 {dimension_numbers = #tpu.dot_dimension_numbers<[2], [1], [1], [2], [0, 0, 0, 1, 1, 2], [0], [0]>} : vector<8x8x8xf32>, vector<8x8x8xf32>, vector<8x8x8xf32> -> vector<8x8x8xf32>
    "tpu.trace_stop"() : () -> ()
    %12 = vector.shape_cast %11 : vector<8x8x8xf32> to vector<4x16x8xf32>
    %c0_5 = arith.constant 0 : index
    %c0_6 = arith.constant 0 : index
    %c0_7 = arith.constant 0 : index
    %13 = vector.load %arg1[%c0_5, %c0_6, %c0_7] : memref<4x8x16xf32, #tpu.memory_space<vmem>>, vector<4x8x16xf32>
    "tpu.trace_start"() <{level = 10 : i32, message = "hbd,hdo->hbo"}> : () -> ()
    %cst_8 = arith.constant dense<0.000000e+00> : vector<4x16x16xf32>
    %14 = tpu.matmul %12, %13, %cst_8 {dimension_numbers = #tpu.dot_dimension_numbers<[2], [1], [1], [2], [0, 0, 0, 1, 1, 2], [0], [0]>} : vector<4x16x8xf32>, vector<4x8x16xf32>, vector<4x16x16xf32> -> vector<4x16x16xf32>
    "tpu.trace_stop"() : () -> ()
    %cst_9 = arith.constant dense<0.000000e+00> : vector<16x16xf32>
    %15 = vector.multi_reduction <add>, %14, %cst_9 [0] : vector<4x16x16xf32> to vector<16x16xf32>
    %c0_10 = arith.constant 0 : index
    %c0_11 = arith.constant 0 : index
    %16 = vector.load %arg2[%c0_10, %c0_11] : memref<1x16xf32, #tpu.memory_space<vmem>>, vector<1x16xf32>
    %17 = vector.broadcast %16 : vector<1x16xf32> to vector<16x16xf32>
    %18 = arith.addf %15, %17 : vector<16x16xf32>
    %c0_12 = arith.constant 0 : index
    %c0_13 = arith.constant 0 : index
    %19 = vector.load %arg3[%c0_12, %c0_13] : memref<16x16xf32, #tpu.memory_space<vmem>>, vector<16x16xf32>
    tpu.vector_store %arg3[%c0_12, %c0_13], %18 {strides = array<i32>} : memref<16x16xf32, #tpu.memory_space<vmem>>, vector<16x16xf32>,
    return
  }
}

</mosaic_0001>

<llo_original>
// kernel: tpu_custom_call.1
$region0: #{tpu_custom_call.1}
  #allocation0 [shape = 'u32[]', space=smem, size = 0x4, offset = 0x4, fixed_abs, tag = 'smem constant byte address 0x4 - core index']
  #allocation1 [shape = 'u32[72,128]{1,0:T(1,128)}', space=vmem, size = 0x9000, scoped, tag = 'internal scratch']
  %s0 = inlined_call_operand.hbm [shape: f32[8,8,8], index: 0, kind: input, shape index: {}]
  %s1 = inlined_call_operand.hbm [shape: f32[4,8,16], index: 1, kind: input, shape index: {}]
  %s2 = inlined_call_operand.vmem [shape: f32[1,16], index: 2, kind: input, shape index: {}]
  %s3 = inlined_call_operand.hbm [shape: f32[16,16], index: 3, kind: output, shape index: {}]
  %s4 = sld [smem:[#allocation0]]
  $region30: #{tpu_custom_call.1} parent=0
    _
  %s6 = ssub.s32 1, %s4
  %s7 = scalar_select 0, %s6, %s4
  $region1: #{tpu_custom_call.1} parent=0
    #allocation2 [shape = 'u8[32768]{0}', space=vmem, size = 0x8000, scoped, tag = 'input window, operand 0, single buffered']
    #allocation3 [shape = 's32[1]{0}', space=sflag, size = 0x4, scoped, tag = 'scoped memory for tpu_custom_call.1']
    #allocation4 [shape = 's32[1]{0}', space=sflag, size = 0x4, scoped, tag = 'scoped memory for tpu_custom_call.1']
    #allocation5 [shape = 'u8[16384]{0}', space=vmem, size = 0x4000, scoped, tag = 'input window, operand 1, single buffered']
    #allocation6 [shape = 's32[1]{0}', space=sflag, size = 0x4, scoped, tag = 'scoped memory for tpu_custom_call.1']
    #allocation7 [shape = 'u8[8192]{0}', space=vmem, size = 0x2000, scoped, tag = 'output window, operand 0, single buffered']
    %8 = vsyncpa [#allocation3], 0
    %9 = vsyncpa [#allocation6], 0
    %10 = vsyncpa [#allocation4], 0
    // Predicated region
    $region2: #{tpu_custom_call.1} parent=1 // pred_check
      _
    $region3: #{tpu_custom_call.1} parent=1 // pred_check_branch
      %12 = sbr.rel (0) target = $region5
    $region4: #{tpu_custom_call.1} parent=1 // pred_region
      %14 = vsyncadd [#allocation3], 0
      %s15 = sshll.u32 %s0, 4
      %s16 = int_to_ptr.hbm [resolvable:$true] %s15
      %s17 = sshll.u32 [#allocation2], 4
      %s18 = int_to_ptr.vmem [resolvable:$true] %s17
      %23 = dma.hbm_to_vmem [thread:$0]  %s16, 1024, %s18, [#allocation3], 128, 128, 8
    $region5: #{tpu_custom_call.1} parent=1 // pred_fallthru
      _
    // Predicated region
    $region6: #{tpu_custom_call.1} parent=1 // pred_check
      _
    $region7: #{tpu_custom_call.1} parent=1 // pred_check_branch
      %25 = sbr.rel (0) target = $region9
    $region8: #{tpu_custom_call.1} parent=1 // pred_region
      %27 = vsyncadd [#allocation6], 0
      %s28 = sshll.u32 %s1, 4
      %s29 = int_to_ptr.hbm [resolvable:$true] %s28
      %s30 = sshll.u32 [#allocation5], 4
      %s31 = int_to_ptr.vmem [resolvable:$true] %s30
      %36 = dma.hbm_to_vmem [thread:$0]  %s29, 512, %s31, [#allocation6], 128, 128, 8
    $region9: #{tpu_custom_call.1} parent=1 // pred_fallthru
      _
    // Predicated region
    $region10: #{tpu_custom_call.1} parent=1 // pred_check
      _
    $region11: #{tpu_custom_call.1} parent=1 // pred_check_branch
      %38 = sbr.rel (0) target = $region13
    $region12: #{tpu_custom_call.1} parent=1 // pred_region
      _
    $region13: #{tpu_custom_call.1} parent=1 // pred_fallthru
      _
    // Predicated region
    $region14: #{tpu_custom_call.1} parent=1 // pred_check
      _
    $region15: #{tpu_custom_call.1} parent=1 // pred_check_branch
      %40 = sbr.rel (0) target = $region17
    $region16: #{tpu_custom_call.1} parent=1 // pred_region
      %42 = dma.done [#allocation3], 1024
    $region17: #{tpu_custom_call.1} parent=1 // pred_fallthru
      _
    // Predicated region
    $region18: #{tpu_custom_call.1} parent=1 // pred_check
      _
    $region19: #{tpu_custom_call.1} parent=1 // pred_check_branch
      %44 = sbr.rel (0) target = $region21
    $region20: #{tpu_custom_call.1} parent=1 // pred_region
      %46 = dma.done [#allocation6], 512
    $region21: #{tpu_custom_call.1} parent=1 // pred_fallthru
      _
    %v47 = vld [vmem:[#allocation2] sm:$0xff]
    %v48 = vld [vmem:[#allocation2 + $0x8] sm:$0xff]
    %v49 = vld [vmem:[#allocation2 + $0x10] sm:$0xff]
    %v50 = vld [vmem:[#allocation2 + $0x18] sm:$0xff]
    %v51 = vld [vmem:[#allocation2 + $0x20] sm:$0xff]
    %v52 = vld [vmem:[#allocation2 + $0x28] sm:$0xff]
    %v53 = vld [vmem:[#allocation2 + $0x30] sm:$0xff]
    %v54 = vld [vmem:[#allocation2 + $0x38] sm:$0xff]
    %vm55 = vcmask 64512
    %v57 = vsel %vm55, %v47, 0
    %59 = vmatpush.xpose.msra.mxu0 0.0
    %60 = vmatpush.xpose.msra.mxu0 0.0
    %61 = vmatpush.xpose.msra.mxu0 0.0
    %62 = vmatpush.xpose.msra.mxu0 0.0
    %63 = vmatpush.xpose.msra.mxu0 0.0
    %64 = vmatpush.xpose.msra.mxu0 0.0
    %65 = vmatpush.xpose.msra.mxu0 0.0
    %66 = vmatpush.xpose.msra.mxu0 0.0
    %67 = vmatpush.xpose.msra.mxu0 0.0
    %68 = vmatpush.xpose.msra.mxu0 0.0
    %69 = vmatpush.xpose.msra.mxu0 0.0
    %70 = vmatpush.xpose.msra.mxu0 0.0
    %71 = vmatpush.xpose.msra.mxu0 0.0
    %72 = vmatpush.xpose.msra.mxu0 0.0
    %73 = vmatpush.xpose.msra.mxu0 0.0
    %74 = vmatpush.xpose.msra.mxu0 %v57
    %75 = vmatmul.f32.gmra.mxu0 %v57
    %v76 = vpop.f32.mrf.mxu0
    %v77 = vadd.f32 0.0, %v76
    %78 = vdwg.mxu0
    %v80 = vsel %vm55, %v48, 0
    %82 = vmatpush.xpose.msra.mxu0 0.0
    %83 = vmatpush.xpose.msra.mxu0 0.0
    %84 = vmatpush.xpose.msra.mxu0 0.0
    %85 = vmatpush.xpose.msra.mxu0 0.0
    %86 = vmatpush.xpose.msra.mxu0 0.0
    %87 = vmatpush.xpose.msra.mxu0 0.0
    %88 = vmatpush.xpose.msra.mxu0 0.0
    %89 = vmatpush.xpose.msra.mxu0 0.0
    %90 = vmatpush.xpose.msra.mxu0 0.0
    %91 = vmatpush.xpose.msra.mxu0 0.0
    %92 = vmatpush.xpose.msra.mxu0 0.0
    %93 = vmatpush.xpose.msra.mxu0 0.0
    %94 = vmatpush.xpose.msra.mxu0 0.0
    %95 = vmatpush.xpose.msra.mxu0 0.0
    %96 = vmatpush.xpose.msra.mxu0 0.0
    %97 = vmatpush.xpose.msra.mxu0 %v80
    %98 = vmatmul.f32.gmra.mxu0 %v80
    %v99 = vpop.f32.mrf.mxu0
    %v100 = vadd.f32 0.0, %v99
    %101 = vdwg.mxu0
    %v103 = vsel %vm55, %v49, 0
    %105 = vmatpush.xpose.msra.mxu0 0.0
    %106 = vmatpush.xpose.msra.mxu0 0.0
    %107 = vmatpush.xpose.msra.mxu0 0.0
    %108 = vmatpush.xpose.msra.mxu0 0.0
    %109 = vmatpush.xpose.msra.mxu0 0.0
    %110 = vmatpush.xpose.msra.mxu0 0.0
    %111 = vmatpush.xpose.msra.mxu0 0.0
    %112 = vmatpush.xpose.msra.mxu0 0.0
    %113 = vmatpush.xpose.msra.mxu0 0.0
    %114 = vmatpush.xpose.msra.mxu0 0.0
    %115 = vmatpush.xpose.msra.mxu0 0.0
    %116 = vmatpush.xpose.msra.mxu0 0.0
    %117 = vmatpush.xpose.msra.mxu0 0.0
    %118 = vmatpush.xpose.msra.mxu0 0.0
    %119 = vmatpush.xpose.msra.mxu0 0.0
    %120 = vmatpush.xpose.msra.mxu0 %v103
    %121 = vmatmul.f32.gmra.mxu0 %v103
    %v122 = vpop.f32.mrf.mxu0
    %v123 = vadd.f32 0.0, %v122
    %124 = vdwg.mxu0
    %v126 = vsel %vm55, %v50, 0
    %128 = vmatpush.xpose.msra.mxu0 0.0
    %129 = vmatpush.xpose.msra.mxu0 0.0
    %130 = vmatpush.xpose.msra.mxu0 0.0
    %131 = vmatpush.xpose.msra.mxu0 0.0
    %132 = vmatpush.xpose.msra.mxu0 0.0
    %133 = vmatpush.xpose.msra.mxu0 0.0
    %134 = vmatpush.xpose.msra.mxu0 0.0
    %135 = vmatpush.xpose.msra.mxu0 0.0
    %136 = vmatpush.xpose.msra.mxu0 0.0
    %137 = vmatpush.xpose.msra.mxu0 0.0
    %138 = vmatpush.xpose.msra.mxu0 0.0
    %139 = vmatpush.xpose.msra.mxu0 0.0
    %140 = vmatpush.xpose.msra.mxu0 0.0
    %141 = vmatpush.xpose.msra.mxu0 0.0
    %142 = vmatpush.xpose.msra.mxu0 0.0
    %143 = vmatpush.xpose.msra.mxu0 %v126
    %144 = vmatmul.f32.gmra.mxu0 %v126
    %v145 = vpop.f32.mrf.mxu0
    %v146 = vadd.f32 0.0, %v145
    %147 = vdwg.mxu0
    %v149 = vsel %vm55, %v51, 0
    %151 = vmatpush.xpose.msra.mxu0 0.0
    %152 = vmatpush.xpose.msra.mxu0 0.0
    %153 = vmatpush.xpose.msra.mxu0 0.0
    %154 = vmatpush.xpose.msra.mxu0 0.0
    %155 = vmatpush.xpose.msra.mxu0 0.0
    %156 = vmatpush.xpose.msra.mxu0 0.0
    %157 = vmatpush.xpose.msra.mxu0 0.0
    %158 = vmatpush.xpose.msra.mxu0 0.0
    %159 = vmatpush.xpose.msra.mxu0 0.0
    %160 = vmatpush.xpose.msra.mxu0 0.0
    %161 = vmatpush.xpose.msra.mxu0 0.0
    %162 = vmatpush.xpose.msra.mxu0 0.0
    %163 = vmatpush.xpose.msra.mxu0 0.0
    %164 = vmatpush.xpose.msra.mxu0 0.0
    %165 = vmatpush.xpose.msra.mxu0 0.0
    %166 = vmatpush.xpose.msra.mxu0 %v149
    %167 = vmatmul.f32.gmra.mxu0 %v149
    %v168 = vpop.f32.mrf.mxu0
    %v169 = vadd.f32 0.0, %v168
    %170 = vdwg.mxu0
    %v172 = vsel %vm55, %v52, 0
    %174 = vmatpush.xpose.msra.mxu0 0.0
    %175 = vmatpush.xpose.msra.mxu0 0.0
    %176 = vmatpush.xpose.msra.mxu0 0.0
    %177 = vmatpush.xpose.msra.mxu0 0.0
    %178 = vmatpush.xpose.msra.mxu0 0.0
    %179 = vmatpush.xpose.msra.mxu0 0.0
    %180 = vmatpush.xpose.msra.mxu0 0.0
    %181 = vmatpush.xpose.msra.mxu0 0.0
    %182 = vmatpush.xpose.msra.mxu0 0.0
    %183 = vmatpush.xpose.msra.mxu0 0.0
    %184 = vmatpush.xpose.msra.mxu0 0.0
    %185 = vmatpush.xpose.msra.mxu0 0.0
    %186 = vmatpush.xpose.msra.mxu0 0.0
    %187 = vmatpush.xpose.msra.mxu0 0.0
    %188 = vmatpush.xpose.msra.mxu0 0.0
    %189 = vmatpush.xpose.msra.mxu0 %v172
    %190 = vmatmul.f32.gmra.mxu0 %v172
    %v191 = vpop.f32.mrf.mxu0
    %v192 = vadd.f32 0.0, %v191
    %193 = vdwg.mxu0
    %v195 = vsel %vm55, %v53, 0
    %197 = vmatpush.xpose.msra.mxu0 0.0
    %198 = vmatpush.xpose.msra.mxu0 0.0
    %199 = vmatpush.xpose.msra.mxu0 0.0
    %200 = vmatpush.xpose.msra.mxu0 0.0
    %201 = vmatpush.xpose.msra.mxu0 0.0
    %202 = vmatpush.xpose.msra.mxu0 0.0
    %203 = vmatpush.xpose.msra.mxu0 0.0
    %204 = vmatpush.xpose.msra.mxu0 0.0
    %205 = vmatpush.xpose.msra.mxu0 0.0
    %206 = vmatpush.xpose.msra.mxu0 0.0
    %207 = vmatpush.xpose.msra.mxu0 0.0
    %208 = vmatpush.xpose.msra.mxu0 0.0
    %209 = vmatpush.xpose.msra.mxu0 0.0
    %210 = vmatpush.xpose.msra.mxu0 0.0
    %211 = vmatpush.xpose.msra.mxu0 0.0
    %212 = vmatpush.xpose.msra.mxu0 %v195
    %213 = vmatmul.f32.gmra.mxu0 %v195
    %v214 = vpop.f32.mrf.mxu0
    %v215 = vadd.f32 0.0, %v214
    %216 = vdwg.mxu0
    %v218 = vsel %vm55, %v54, 0
    %220 = vmatpush.xpose.msra.mxu0 0.0
    %221 = vmatpush.xpose.msra.mxu0 0.0
    %222 = vmatpush.xpose.msra.mxu0 0.0
    %223 = vmatpush.xpose.msra.mxu0 0.0
    %224 = vmatpush.xpose.msra.mxu0 0.0
    %225 = vmatpush.xpose.msra.mxu0 0.0
    %226 = vmatpush.xpose.msra.mxu0 0.0
    %227 = vmatpush.xpose.msra.mxu0 0.0
    %228 = vmatpush.xpose.msra.mxu0 0.0
    %229 = vmatpush.xpose.msra.mxu0 0.0
    %230 = vmatpush.xpose.msra.mxu0 0.0
    %231 = vmatpush.xpose.msra.mxu0 0.0
    %232 = vmatpush.xpose.msra.mxu0 0.0
    %233 = vmatpush.xpose.msra.mxu0 0.0
    %234 = vmatpush.xpose.msra.mxu0 0.0
    %235 = vmatpush.xpose.msra.mxu0 %v218
    %236 = vmatmul.f32.gmra.mxu0 %v218
    %v237 = vpop.f32.mrf.mxu0
    %v238 = vadd.f32 0.0, %v237
    %239 = vdwg.mxu0
    %v240 = vsel %vm55, %v77, -inf
    %241 = vmax.xlane.f32.xlu0 %v240
    %v242 = vpop.xlane.xlu0 %241
    %v243 = vsel %vm55, %v100, -inf
    %244 = vmax.xlane.f32.xlu0 %v243
    %v245 = vpop.xlane.xlu0 %244
    %v246 = vsel %vm55, %v123, -inf
    %247 = vmax.xlane.f32.xlu0 %v246
    %v248 = vpop.xlane.xlu0 %247
    %v249 = vsel %vm55, %v146, -inf
    %250 = vmax.xlane.f32.xlu0 %v249
    %v251 = vpop.xlane.xlu0 %250
    %v252 = vsel %vm55, %v169, -inf
    %253 = vmax.xlane.f32.xlu0 %v252
    %v254 = vpop.xlane.xlu0 %253
    %v255 = vsel %vm55, %v192, -inf
    %256 = vmax.xlane.f32.xlu0 %v255
    %v257 = vpop.xlane.xlu0 %256
    %v258 = vsel %vm55, %v215, -inf
    %259 = vmax.xlane.f32.xlu0 %v258
    %v260 = vpop.xlane.xlu0 %259
    %v261 = vsel %vm55, %v238, -inf
    %262 = vmax.xlane.f32.xlu0 %v261
    %v263 = vpop.xlane.xlu0 %262
    %v264 = vsub.f32 %v77, %v242
    %v265 = vsub.f32 %v100, %v245
    %v266 = vsub.f32 %v123, %v248
    %v267 = vsub.f32 %v146, %v251
    %v268 = vsub.f32 %v169, %v254
    %v269 = vsub.f32 %v192, %v257
    %v270 = vsub.f32 %v215, %v260
    %v271 = vsub.f32 %v238, %v263
    %v272 = vmul.f32 %v264, 1.442695
    %v273 = vpow.pop %v272
    %v274 = vmul.f32 %v265, 1.442695
    %v275 = vpow.pop %v274
    %v276 = vmul.f32 %v266, 1.442695
    %v277 = vpow.pop %v276
    %v278 = vmul.f32 %v267, 1.442695
    %v279 = vpow.pop %v278
    %v280 = vmul.f32 %v268, 1.442695
    %v281 = vpow.pop %v280
    %v282 = vmul.f32 %v269, 1.442695
    %v283 = vpow.pop %v282
    %v284 = vmul.f32 %v270, 1.442695
    %v285 = vpow.pop %v284
    %v286 = vmul.f32 %v271, 1.442695
    %v287 = vpow.pop %v286
    %v288 = vsel %vm55, %v273, 0.0
    %289 = vadd.xlane.f32.xlu0 %v288
    %v290 = vpop.xlane.xlu0 %289
    %v291 = vsel %vm55, %v275, 0.0
    %292 = vadd.xlane.f32.xlu0 %v291
    %v293 = vpop.xlane.xlu0 %292
    %v294 = vsel %vm55, %v277, 0.0
    %295 = vadd.xlane.f32.xlu0 %v294
    %v296 = vpop.xlane.xlu0 %295
    %v297 = vsel %vm55, %v279, 0.0
    %298 = vadd.xlane.f32.xlu0 %v297
    %v299 = vpop.xlane.xlu0 %298
    %v300 = vsel %vm55, %v281, 0.0
    %301 = vadd.xlane.f32.xlu0 %v300
    %v302 = vpop.xlane.xlu0 %301
    %v303 = vsel %vm55, %v283, 0.0
    %304 = vadd.xlane.f32.xlu0 %v303
    %v305 = vpop.xlane.xlu0 %304
    %v306 = vsel %vm55, %v285, 0.0
    %307 = vadd.xlane.f32.xlu0 %v306
    %v308 = vpop.xlane.xlu0 %307
    %v309 = vsel %vm55, %v287, 0.0
    %310 = vadd.xlane.f32.xlu0 %v309
    %v311 = vpop.xlane.xlu0 %310
    %v312 = vrcp.pop %v290
    %v313 = vmul.f32 %v290, %v312
    %v314 = vsub.f32 1.0, %v313
    %v315 = vmul.f32 %v312, %v314
    %v316 = vadd.f32 %v312, %v315
    %vm317 = vweird.f32 %v290
    %vm318 = vweird.f32 %v312
    %vm319 = vmor %vm317, %vm318
    %v320 = vsel %vm319, %v312, %v316
    %v321 = vand.u32 2147483647, %v290
    %vm322 = vcmp.eq.f32.partialorder %v321, 8.507059e+37
    %v323 = vand.u32 %v290, 2147483648
    %v324 = vor.u32 1.1754944e-38, %v323
    %v325 = vsel %vm322, %v324, %v320
    %v326 = vmul.f32 %v273, %v325
    %v327 = vrcp.pop %v293
    %v328 = vmul.f32 %v293, %v327
    %v329 = vsub.f32 1.0, %v328
    %v330 = vmul.f32 %v327, %v329
    %v331 = vadd.f32 %v327, %v330
    %vm332 = vweird.f32 %v293
    %vm333 = vweird.f32 %v327
    %vm334 = vmor %vm332, %vm333
    %v335 = vsel %vm334, %v327, %v331
    %v336 = vand.u32 2147483647, %v293
    %vm337 = vcmp.eq.f32.partialorder %v336, 8.507059e+37
    %v338 = vand.u32 %v293, 2147483648
    %v339 = vor.u32 1.1754944e-38, %v338
    %v340 = vsel %vm337, %v339, %v335
    %v341 = vmul.f32 %v275, %v340
    %v342 = vrcp.pop %v296
    %v343 = vmul.f32 %v296, %v342
    %v344 = vsub.f32 1.0, %v343
    %v345 = vmul.f32 %v342, %v344
    %v346 = vadd.f32 %v342, %v345
    %vm347 = vweird.f32 %v296
    %vm348 = vweird.f32 %v342
    %vm349 = vmor %vm347, %vm348
    %v350 = vsel %vm349, %v342, %v346
    %v351 = vand.u32 2147483647, %v296
    %vm352 = vcmp.eq.f32.partialorder %v351, 8.507059e+37
    %v353 = vand.u32 %v296, 2147483648
    %v354 = vor.u32 1.1754944e-38, %v353
    %v355 = vsel %vm352, %v354, %v350
    %v356 = vmul.f32 %v277, %v355
    %v357 = vrcp.pop %v299
    %v358 = vmul.f32 %v299, %v357
    %v359 = vsub.f32 1.0, %v358
    %v360 = vmul.f32 %v357, %v359
    %v361 = vadd.f32 %v357, %v360
    %vm362 = vweird.f32 %v299
    %vm363 = vweird.f32 %v357
    %vm364 = vmor %vm362, %vm363
    %v365 = vsel %vm364, %v357, %v361
    %v366 = vand.u32 2147483647, %v299
    %vm367 = vcmp.eq.f32.partialorder %v366, 8.507059e+37
    %v368 = vand.u32 %v299, 2147483648
    %v369 = vor.u32 1.1754944e-38, %v368
    %v370 = vsel %vm367, %v369, %v365
    %v371 = vmul.f32 %v279, %v370
    %v372 = vrcp.pop %v302
    %v373 = vmul.f32 %v302, %v372
    %v374 = vsub.f32 1.0, %v373
    %v375 = vmul.f32 %v372, %v374
    %v376 = vadd.f32 %v372, %v375
    %vm377 = vweird.f32 %v302
    %vm378 = vweird.f32 %v372
    %vm379 = vmor %vm377, %vm378
    %v380 = vsel %vm379, %v372, %v376
    %v381 = vand.u32 2147483647, %v302
    %vm382 = vcmp.eq.f32.partialorder %v381, 8.507059e+37
    %v383 = vand.u32 %v302, 2147483648
    %v384 = vor.u32 1.1754944e-38, %v383
    %v385 = vsel %vm382, %v384, %v380
    %v386 = vmul.f32 %v281, %v385
    %v387 = vrcp.pop %v305
    %v388 = vmul.f32 %v305, %v387
    %v389 = vsub.f32 1.0, %v388
    %v390 = vmul.f32 %v387, %v389
    %v391 = vadd.f32 %v387, %v390
    %vm392 = vweird.f32 %v305
    %vm393 = vweird.f32 %v387
    %vm394 = vmor %vm392, %vm393
    %v395 = vsel %vm394, %v387, %v391
    %v396 = vand.u32 2147483647, %v305
    %vm397 = vcmp.eq.f32.partialorder %v396, 8.507059e+37
    %v398 = vand.u32 %v305, 2147483648
    %v399 = vor.u32 1.1754944e-38, %v398
    %v400 = vsel %vm397, %v399, %v395
    %v401 = vmul.f32 %v283, %v400
    %v402 = vrcp.pop %v308
    %v403 = vmul.f32 %v308, %v402
    %v404 = vsub.f32 1.0, %v403
    %v405 = vmul.f32 %v402, %v404
    %v406 = vadd.f32 %v402, %v405
    %vm407 = vweird.f32 %v308
    %vm408 = vweird.f32 %v402
    %vm409 = vmor %vm407, %vm408
    %v410 = vsel %vm409, %v402, %v406
    %v411 = vand.u32 2147483647, %v308
    %vm412 = vcmp.eq.f32.partialorder %v411, 8.507059e+37
    %v413 = vand.u32 %v308, 2147483648
    %v414 = vor.u32 1.1754944e-38, %v413
    %v415 = vsel %vm412, %v414, %v410
    %v416 = vmul.f32 %v285, %v415
    %v417 = vrcp.pop %v311
    %v418 = vmul.f32 %v311, %v417
    %v419 = vsub.f32 1.0, %v418
    %v420 = vmul.f32 %v417, %v419
    %v421 = vadd.f32 %v417, %v420
    %vm422 = vweird.f32 %v311
    %vm423 = vweird.f32 %v417
    %vm424 = vmor %vm422, %vm423
    %v425 = vsel %vm424, %v417, %v421
    %v426 = vand.u32 2147483647, %v311
    %vm427 = vcmp.eq.f32.partialorder %v426, 8.507059e+37
    %v428 = vand.u32 %v311, 2147483648
    %v429 = vor.u32 1.1754944e-38, %v428
    %v430 = vsel %vm427, %v429, %v425
    %v431 = vmul.f32 %v287, %v430
    %v433 = vsel %vm55, %v326, 0
    %435 = vmatpush.msra.mxu0 0.0
    %436 = vmatpush.msra.mxu0 0.0
    %437 = vmatpush.msra.mxu0 0.0
    %438 = vmatpush.msra.mxu0 0.0
    %439 = vmatpush.msra.mxu0 0.0
    %440 = vmatpush.msra.mxu0 0.0
    %441 = vmatpush.msra.mxu0 0.0
    %442 = vmatpush.msra.mxu0 0.0
    %443 = vmatpush.msra.mxu0 0.0
    %444 = vmatpush.msra.mxu0 0.0
    %445 = vmatpush.msra.mxu0 0.0
    %446 = vmatpush.msra.mxu0 0.0
    %447 = vmatpush.msra.mxu0 0.0
    %448 = vmatpush.msra.mxu0 0.0
    %449 = vmatpush.msra.mxu0 0.0
    %450 = vmatpush.msra.mxu0 %v47
    %451 = vmatmul.f32.gmra.mxu0 %v433
    %v452 = vpop.f32.mrf.mxu0
    %v453 = vadd.f32 0.0, %v452
    %454 = vdwg.mxu0
    %v456 = vsel %vm55, %v341, 0
    %458 = vmatpush.msra.mxu0 0.0
    %459 = vmatpush.msra.mxu0 0.0
    %460 = vmatpush.msra.mxu0 0.0
    %461 = vmatpush.msra.mxu0 0.0
    %462 = vmatpush.msra.mxu0 0.0
    %463 = vmatpush.msra.mxu0 0.0
    %464 = vmatpush.msra.mxu0 0.0
    %465 = vmatpush.msra.mxu0 0.0
    %466 = vmatpush.msra.mxu0 0.0
    %467 = vmatpush.msra.mxu0 0.0
    %468 = vmatpush.msra.mxu0 0.0
    %469 = vmatpush.msra.mxu0 0.0
    %470 = vmatpush.msra.mxu0 0.0
    %471 = vmatpush.msra.mxu0 0.0
    %472 = vmatpush.msra.mxu0 0.0
    %473 = vmatpush.msra.mxu0 %v48
    %474 = vmatmul.f32.gmra.mxu0 %v456
    %v475 = vpop.f32.mrf.mxu0
    %v476 = vadd.f32 0.0, %v475
    %477 = vdwg.mxu0
    %v479 = vsel %vm55, %v356, 0
    %481 = vmatpush.msra.mxu0 0.0
    %482 = vmatpush.msra.mxu0 0.0
    %483 = vmatpush.msra.mxu0 0.0
    %484 = vmatpush.msra.mxu0 0.0
    %485 = vmatpush.msra.mxu0 0.0
    %486 = vmatpush.msra.mxu0 0.0
    %487 = vmatpush.msra.mxu0 0.0
    %488 = vmatpush.msra.mxu0 0.0
    %489 = vmatpush.msra.mxu0 0.0
    %490 = vmatpush.msra.mxu0 0.0
    %491 = vmatpush.msra.mxu0 0.0
    %492 = vmatpush.msra.mxu0 0.0
    %493 = vmatpush.msra.mxu0 0.0
    %494 = vmatpush.msra.mxu0 0.0
    %495 = vmatpush.msra.mxu0 0.0
    %496 = vmatpush.msra.mxu0 %v49
    %497 = vmatmul.f32.gmra.mxu0 %v479
    %v498 = vpop.f32.mrf.mxu0
    %v499 = vadd.f32 0.0, %v498
    %500 = vdwg.mxu0
    %v502 = vsel %vm55, %v371, 0
    %504 = vmatpush.msra.mxu0 0.0
    %505 = vmatpush.msra.mxu0 0.0
    %506 = vmatpush.msra.mxu0 0.0
    %507 = vmatpush.msra.mxu0 0.0
    %508 = vmatpush.msra.mxu0 0.0
    %509 = vmatpush.msra.mxu0 0.0
    %510 = vmatpush.msra.mxu0 0.0
    %511 = vmatpush.msra.mxu0 0.0
    %512 = vmatpush.msra.mxu0 0.0
    %513 = vmatpush.msra.mxu0 0.0
    %514 = vmatpush.msra.mxu0 0.0
    %515 = vmatpush.msra.mxu0 0.0
    %516 = vmatpush.msra.mxu0 0.0
    %517 = vmatpush.msra.mxu0 0.0
    %518 = vmatpush.msra.mxu0 0.0
    %519 = vmatpush.msra.mxu0 %v50
    %520 = vmatmul.f32.gmra.mxu0 %v502
    %v521 = vpop.f32.mrf.mxu0
    %v522 = vadd.f32 0.0, %v521
    %523 = vdwg.mxu0
    %v525 = vsel %vm55, %v386, 0
    %527 = vmatpush.msra.mxu0 0.0
    %528 = vmatpush.msra.mxu0 0.0
    %529 = vmatpush.msra.mxu0 0.0
    %530 = vmatpush.msra.mxu0 0.0
    %531 = vmatpush.msra.mxu0 0.0
    %532 = vmatpush.msra.mxu0 0.0
    %533 = vmatpush.msra.mxu0 0.0
    %534 = vmatpush.msra.mxu0 0.0
    %535 = vmatpush.msra.mxu0 0.0
    %536 = vmatpush.msra.mxu0 0.0
    %537 = vmatpush.msra.mxu0 0.0
    %538 = vmatpush.msra.mxu0 0.0
    %539 = vmatpush.msra.mxu0 0.0
    %540 = vmatpush.msra.mxu0 0.0
    %541 = vmatpush.msra.mxu0 0.0
    %542 = vmatpush.msra.mxu0 %v51
    %543 = vmatmul.f32.gmra.mxu0 %v525
    %v544 = vpop.f32.mrf.mxu0
    %v545 = vadd.f32 0.0, %v544
    %546 = vdwg.mxu0
    %v548 = vsel %vm55, %v401, 0
    %550 = vmatpush.msra.mxu0 0.0
    %551 = vmatpush.msra.mxu0 0.0
    %552 = vmatpush.msra.mxu0 0.0
    %553 = vmatpush.msra.mxu0 0.0
    %554 = vmatpush.msra.mxu0 0.0
    %555 = vmatpush.msra.mxu0 0.0
    %556 = vmatpush.msra.mxu0 0.0
    %557 = vmatpush.msra.mxu0 0.0
    %558 = vmatpush.msra.mxu0 0.0
    %559 = vmatpush.msra.mxu0 0.0
    %560 = vmatpush.msra.mxu0 0.0
    %561 = vmatpush.msra.mxu0 0.0
    %562 = vmatpush.msra.mxu0 0.0
    %563 = vmatpush.msra.mxu0 0.0
    %564 = vmatpush.msra.mxu0 0.0
    %565 = vmatpush.msra.mxu0 %v52
    %566 = vmatmul.f32.gmra.mxu0 %v548
    %v567 = vpop.f32.mrf.mxu0
    %v568 = vadd.f32 0.0, %v567
    %569 = vdwg.mxu0
    %v571 = vsel %vm55, %v416, 0
    %573 = vmatpush.msra.mxu0 0.0
    %574 = vmatpush.msra.mxu0 0.0
    %575 = vmatpush.msra.mxu0 0.0
    %576 = vmatpush.msra.mxu0 0.0
    %577 = vmatpush.msra.mxu0 0.0
    %578 = vmatpush.msra.mxu0 0.0
    %579 = vmatpush.msra.mxu0 0.0
    %580 = vmatpush.msra.mxu0 0.0
    %581 = vmatpush.msra.mxu0 0.0
    %582 = vmatpush.msra.mxu0 0.0
    %583 = vmatpush.msra.mxu0 0.0
    %584 = vmatpush.msra.mxu0 0.0
    %585 = vmatpush.msra.mxu0 0.0
    %586 = vmatpush.msra.mxu0 0.0
    %587 = vmatpush.msra.mxu0 0.0
    %588 = vmatpush.msra.mxu0 %v53
    %589 = vmatmul.f32.gmra.mxu0 %v571
    %v590 = vpop.f32.mrf.mxu0
    %v591 = vadd.f32 0.0, %v590
    %592 = vdwg.mxu0
    %v594 = vsel %vm55, %v431, 0
    %596 = vmatpush.msra.mxu0 0.0
    %597 = vmatpush.msra.mxu0 0.0
    %598 = vmatpush.msra.mxu0 0.0
    %599 = vmatpush.msra.mxu0 0.0
    %600 = vmatpush.msra.mxu0 0.0
    %601 = vmatpush.msra.mxu0 0.0
    %602 = vmatpush.msra.mxu0 0.0
    %603 = vmatpush.msra.mxu0 0.0
    %604 = vmatpush.msra.mxu0 0.0
    %605 = vmatpush.msra.mxu0 0.0
    %606 = vmatpush.msra.mxu0 0.0
    %607 = vmatpush.msra.mxu0 0.0
    %608 = vmatpush.msra.mxu0 0.0
    %609 = vmatpush.msra.mxu0 0.0
    %610 = vmatpush.msra.mxu0 0.0
    %611 = vmatpush.msra.mxu0 %v54
    %612 = vmatmul.f32.gmra.mxu0 %v594
    %v613 = vpop.f32.mrf.mxu0
    %v614 = vadd.f32 0.0, %v613
    %615 = vdwg.mxu0
    %v616 = vld [vmem:[#allocation5] sm:$0xff]
    %v617 = vld [vmem:[#allocation5 + $0x8] sm:$0xff]
    %v618 = vld [vmem:[#allocation5 + $0x10] sm:$0xff]
    %v619 = vld [vmem:[#allocation5 + $0x18] sm:$0xff]
    %v621 = vsel %vm55, %v453, 0
    %v624 = vsel %vm55, %v476, 0
    %626 = vmatpush.msra.mxu0 0.0
    %627 = vmatpush.msra.mxu0 0.0
    %628 = vmatpush.msra.mxu0 0.0
    %629 = vmatpush.msra.mxu0 0.0
    %630 = vmatpush.msra.mxu0 0.0
    %631 = vmatpush.msra.mxu0 0.0
    %632 = vmatpush.msra.mxu0 0.0
    %633 = vmatpush.msra.mxu0 0.0
    %634 = vmatpush.msra.mxu0 0.0
    %635 = vmatpush.msra.mxu0 0.0
    %636 = vmatpush.msra.mxu0 0.0
    %637 = vmatpush.msra.mxu0 0.0
    %638 = vmatpush.msra.mxu0 0.0
    %639 = vmatpush.msra.mxu0 0.0
    %640 = vmatpush.msra.mxu0 0.0
    %641 = vmatpush.msra.mxu0 %v616
    %642 = vmatmul.f32.gmra.mxu0 %v621
    %v643 = vpop.f32.mrf.mxu0
    %v644 = vadd.f32 0.0, %v643
    %645 = vmatmul.f32.gmra.mxu0 %v624
    %v646 = vpop.f32.mrf.mxu0
    %v647 = vadd.f32 0.0, %v646
    %648 = vdwg.mxu0
    %v650 = vsel %vm55, %v499, 0
    %v653 = vsel %vm55, %v522, 0
    %655 = vmatpush.msra.mxu0 0.0
    %656 = vmatpush.msra.mxu0 0.0
    %657 = vmatpush.msra.mxu0 0.0
    %658 = vmatpush.msra.mxu0 0.0
    %659 = vmatpush.msra.mxu0 0.0
    %660 = vmatpush.msra.mxu0 0.0
    %661 = vmatpush.msra.mxu0 0.0
    %662 = vmatpush.msra.mxu0 0.0
    %663 = vmatpush.msra.mxu0 0.0
    %664 = vmatpush.msra.mxu0 0.0
    %665 = vmatpush.msra.mxu0 0.0
    %666 = vmatpush.msra.mxu0 0.0
    %667 = vmatpush.msra.mxu0 0.0
    %668 = vmatpush.msra.mxu0 0.0
    %669 = vmatpush.msra.mxu0 0.0
    %670 = vmatpush.msra.mxu0 %v617
    %671 = vmatmul.f32.gmra.mxu0 %v650
    %v672 = vpop.f32.mrf.mxu0
    %v673 = vadd.f32 0.0, %v672
    %674 = vmatmul.f32.gmra.mxu0 %v653
    %v675 = vpop.f32.mrf.mxu0
    %v676 = vadd.f32 0.0, %v675
    %677 = vdwg.mxu0
    %v679 = vsel %vm55, %v545, 0
    %v682 = vsel %vm55, %v568, 0
    %684 = vmatpush.msra.mxu0 0.0
    %685 = vmatpush.msra.mxu0 0.0
    %686 = vmatpush.msra.mxu0 0.0
    %687 = vmatpush.msra.mxu0 0.0
    %688 = vmatpush.msra.mxu0 0.0
    %689 = vmatpush.msra.mxu0 0.0
    %690 = vmatpush.msra.mxu0 0.0
    %691 = vmatpush.msra.mxu0 0.0
    %692 = vmatpush.msra.mxu0 0.0
    %693 = vmatpush.msra.mxu0 0.0
    %694 = vmatpush.msra.mxu0 0.0
    %695 = vmatpush.msra.mxu0 0.0
    %696 = vmatpush.msra.mxu0 0.0
    %697 = vmatpush.msra.mxu0 0.0
    %698 = vmatpush.msra.mxu0 0.0
    %699 = vmatpush.msra.mxu0 %v618
    %700 = vmatmul.f32.gmra.mxu0 %v679
    %v701 = vpop.f32.mrf.mxu0
    %v702 = vadd.f32 0.0, %v701
    %703 = vmatmul.f32.gmra.mxu0 %v682
    %v704 = vpop.f32.mrf.mxu0
    %v705 = vadd.f32 0.0, %v704
    %706 = vdwg.mxu0
    %v708 = vsel %vm55, %v591, 0
    %v711 = vsel %vm55, %v614, 0
    %713 = vmatpush.msra.mxu0 0.0
    %714 = vmatpush.msra.mxu0 0.0
    %715 = vmatpush.msra.mxu0 0.0
    %716 = vmatpush.msra.mxu0 0.0
    %717 = vmatpush.msra.mxu0 0.0
    %718 = vmatpush.msra.mxu0 0.0
    %719 = vmatpush.msra.mxu0 0.0
    %720 = vmatpush.msra.mxu0 0.0
    %721 = vmatpush.msra.mxu0 0.0
    %722 = vmatpush.msra.mxu0 0.0
    %723 = vmatpush.msra.mxu0 0.0
    %724 = vmatpush.msra.mxu0 0.0
    %725 = vmatpush.msra.mxu0 0.0
    %726 = vmatpush.msra.mxu0 0.0
    %727 = vmatpush.msra.mxu0 0.0
    %728 = vmatpush.msra.mxu0 %v619
    %729 = vmatmul.f32.gmra.mxu0 %v708
    %v730 = vpop.f32.mrf.mxu0
    %v731 = vadd.f32 0.0, %v730
    %732 = vmatmul.f32.gmra.mxu0 %v711
    %v733 = vpop.f32.mrf.mxu0
    %v734 = vadd.f32 0.0, %v733
    %735 = vdwg.mxu0
    %vm736 = vcmask 130048
    %v737 = vsel %vm736, %v644, 0.0
    %v738 = vsel %vm736, %v673, 0.0
    %v739 = vadd.f32 %v737, %v738
    %v740 = vsel %vm736, %v702, 0.0
    %v741 = vadd.f32 %v739, %v740
    %v742 = vsel %vm736, %v731, 0.0
    %v743 = vadd.f32 %v741, %v742
    %v744 = vsel %vm736, %v647, 0.0
    %v745 = vsel %vm736, %v676, 0.0
    %v746 = vadd.f32 %v744, %v745
    %v747 = vsel %vm736, %v705, 0.0
    %v748 = vadd.f32 %v746, %v747
    %v749 = vsel %vm736, %v734, 0.0
    %v750 = vadd.f32 %v748, %v749
    %v751 = vld [vmem:[%s2] sm:$0x1]
    %v753 = vperm.slane %v751, 0
    %v755 = vadd.f32 %v743, %v753
    %v756 = vadd.f32 %v750, %v753
    %757 = vst.msk [vmem:[#allocation7] sm:$0xff] %vm736, %v755
    %758 = vst.msk [vmem:[#allocation7 + $0x8] sm:$0xff] %vm736, %v756
    // Predicated region
    $region22: #{tpu_custom_call.1} parent=1 // pred_check
      _
    $region23: #{tpu_custom_call.1} parent=1 // pred_check_branch
      %760 = sbr.rel (0) target = $region25
    $region24: #{tpu_custom_call.1} parent=1 // pred_region
      %762 = vsyncadd [#allocation4], 0
      %s763 = sshll.u32 [#allocation7], 4
      %s764 = int_to_ptr.vmem [resolvable:$true] %s763
      %s765 = sshll.u32 %s3, 4
      %s766 = int_to_ptr.hbm [resolvable:$true] %s765
      %771 = dma.vmem_to_hbm [thread:$0]  %s764, 256, %s766, [#allocation4], 128, 128, 8
    $region25: #{tpu_custom_call.1} parent=1 // pred_fallthru
      _
    // Predicated region
    $region26: #{tpu_custom_call.1} parent=1 // pred_check
      _
    $region27: #{tpu_custom_call.1} parent=1 // pred_check_branch
      %773 = sbr.rel (0) target = $region29
    $region28: #{tpu_custom_call.1} parent=1 // pred_region
      %775 = dma.done [#allocation4], 256
    $region29: #{tpu_custom_call.1} parent=1 // pred_fallthru
      _
    %776 = vsyncpa [#allocation3], 1
    %777 = vsyncpa [#allocation6], 1
    %778 = vsyncpa [#allocation4], 1

</llo_original>
